<compile_context>
chip_gen: v5e
topology: v5e:2x2
jax: 0.10.0
libtpu: 0.0.40
codegen_flags: <defaults>
</compile_context>

<pallas_src>
import functools

import jax
import jax.numpy as jnp
from jax.experimental import pallas as pl
from jax.experimental.pallas import tpu as pltpu


def _round_up(n, m):
    return ((n + m - 1) // m) * m


def _vmem_capacity_bytes():
    """Generation-aware VMEM capacity (128 MiB v5e/v6e, 64 MiB per-TC v7x)."""
    try:
        return int(pltpu.get_tpu_info().vmem_capacity_bytes)
    except Exception:
        return 64 << 20  # conservative fallback (v7x per-TensorCore VMEM)


# ----------------------------------------------------------------------------
# Kernels
# ----------------------------------------------------------------------------
def mlp_resident_kernel(x_ref, w_in_ref, wh_ref, bh_ref, w_out_ref, o_ref, *,
                        num_layers):
    """All weights resident in VMEM; batch tiles pipelined over a 1-D grid.

    Weights are pre-transposed and bf16; activations are cast to bf16 right
    before each MXU matmul, accumulation and the bias/ReLU epilogue stay f32.
    """
    h = jnp.dot(x_ref[...].astype(jnp.bfloat16), w_in_ref[...],
                preferred_element_type=jnp.float32)
    for i in range(num_layers):  # static unroll (num_layers is small)
        h = jnp.dot(h.astype(jnp.bfloat16), wh_ref[i],
                    preferred_element_type=jnp.float32)
        h = jnp.maximum(h + bh_ref[i], 0.0)  # f32 bias-add + ReLU on the VPU
    o_ref[...] = jnp.dot(h.astype(jnp.bfloat16), w_out_ref[...],
                         preferred_element_type=jnp.float32)


def mlp_streaming_kernel(x_ref, w_in_ref, wh_ref, bh_ref, w_out_ref, o_ref,
                         h_ref, *, num_layers):
    """Hidden-layer weights streamed over the inner ("arbitrary") layer axis.

    grid = (batch_tiles, num_layers); the running activation lives in a VMEM
    scratch that persists across the layer axis, while Pallas double-buffers
    the (1, H, H) per-layer weight block DMA behind the previous layer's matmul.
    """
    layer = pl.program_id(1)

    @pl.when(layer == 0)
    def _():  # input projection once per batch tile
        h_ref[...] = jnp.dot(x_ref[...].astype(jnp.bfloat16), w_in_ref[...],
                             preferred_element_type=jnp.float32)

    h = jnp.dot(h_ref[...].astype(jnp.bfloat16), wh_ref[0],
                preferred_element_type=jnp.float32)
    h_ref[...] = jnp.maximum(h + bh_ref[0], 0.0)

    @pl.when(layer == num_layers - 1)
    def _():  # output projection once per batch tile
        o_ref[...] = jnp.dot(h_ref[...].astype(jnp.bfloat16), w_out_ref[...],
                             preferred_element_type=jnp.float32)


# ----------------------------------------------------------------------------
# One-time parameter preparation (hoisted out of the forward hot path)
# ----------------------------------------------------------------------------
def prepare_params(w_in, wh, bh, w_out):
    """Zero-pad to lane-dense dims, pre-transpose, cast matmul weights to bf16.

    w_in:(H,in), wh:(L,H,H), bh:(L,H) or (L,1,H), w_out:(C,H)  [PyTorch layout].
    Call once; the returned dict is reused across forward calls.
    Zero padding is exact through matmul + bias + ReLU and is sliced off later.
    """
    H, in_sz = w_in.shape
    C = w_out.shape[0]
    L = wh.shape[0]
    in_p, H_p, C_p = _round_up(in_sz, 128), _round_up(H, 128), _round_up(C, 128)
    Ls = max(L, 1)  # keep a non-empty (dummy, all-zero) slab when num_layers == 0
    bf16, f32 = jnp.bfloat16, jnp.float32

    w_in_t = jnp.zeros((in_p, H_p), bf16).at[:in_sz, :H].set(
        jnp.swapaxes(w_in, 0, 1).astype(bf16))
    wh_t = jnp.zeros((Ls, H_p, H_p), bf16).at[:L, :H, :H].set(
        jnp.swapaxes(wh, 1, 2).astype(bf16))
    bh_p = jnp.zeros((Ls, H_p), f32).at[:L, :H].set(
        jnp.reshape(bh, (L, H)).astype(f32))
    w_out_t = jnp.zeros((H_p, C_p), bf16).at[:H, :C].set(
        jnp.swapaxes(w_out, 0, 1).astype(bf16))

    return dict(w_in=w_in_t, wh=wh_t, bh=bh_p, w_out=w_out_t,
                in_size=in_sz, hidden=H, classes=C, layers=L)


# ----------------------------------------------------------------------------
# Forward
# ----------------------------------------------------------------------------
def neuralnet_forward(x, params, force_streaming=None):
    """x:(B,in) f32, params from prepare_params -> (B, num_classes) f32."""
    B, in_sz = x.shape
    assert in_sz == params["in_size"]
    L = params["layers"]
    C = params["classes"]
    f32 = jnp.float32

    in_p, H_p = params["w_in"].shape
    C_p = params["w_out"].shape[1]
    Ls = params["wh"].shape[0]

    # Batch tile: 256 rows feed the 256-wide v6e/v7x MXU better once the batch
    # is large; sublane-aligned single tile for small batches.
    # TODO(synk): gate tm=256 on chip generation (v5e MXU is 128-wide) and shrink
    # tm when B_p // tm < 2 on v7x so the "parallel" axis feeds both TensorCores.
    tm = 256 if B >= 512 else min(128, _round_up(B, 8))
    B_p = _round_up(B, tm)

    # Per-call input padding only (weights were prepared once).
    x_p = jnp.zeros((B_p, in_p), f32).at[:B, :in_sz].set(x.astype(f32))

    # ---- VMEM policy (generation-aware) ------------------------------------
    cap = _vmem_capacity_bytes()
    usable = cap - max(8 << 20, cap // 10)          # headroom for compiler scratch
    vmem_limit = int(usable)

    # Resident footprint: bf16 weights + f32 biases, counted at 2 pipeline
    # buffers each (constant-index blocks may still be double-buffered), plus
    # double-buffered f32 I/O tiles and unrolled-loop activations.
    weight_bytes = (in_p * H_p + Ls * H_p * H_p + H_p * C_p) * 2 + Ls * H_p * 4
    io_bytes = 2 * tm * (in_p + C_p) * 4
    act_bytes = 4 * tm * max(H_p, C_p, in_p) * 4
    resident_need = 2 * weight_bytes + io_bytes + act_bytes

    use_streaming = (resident_need > usable) and L >= 1
    if force_streaming is not None:
        use_streaming = bool(force_streaming) and L >= 1

    if not use_streaming:
        # ---- Path A: all weights resident, batch-only grid -----------------
        grid = (B_p // tm,)
        out_p = pl.pallas_call(
            functools.partial(mlp_resident_kernel, num_layers=L),
            out_shape=jax.ShapeDtypeStruct((B_p, C_p), f32),
            grid_spec=pltpu.PrefetchScalarGridSpec(
                num_scalar_prefetch=0,
                grid=grid,
                in_specs=[
                    pl.BlockSpec((tm, in_p), lambda i: (i, 0)),        # x tile
                    pl.BlockSpec((in_p, H_p), lambda i: (0, 0)),       # w_in
                    pl.BlockSpec((Ls, H_p, H_p), lambda i: (0, 0, 0)),  # hidden W
                    pl.BlockSpec((Ls, H_p), lambda i: (0, 0)),         # biases
                    pl.BlockSpec((H_p, C_p), lambda i: (0, 0)),        # w_out
                ],
                out_specs=pl.BlockSpec((tm, C_p), lambda i: (i, 0)),
            ),
            compiler_params=pltpu.CompilerParams(
                dimension_semantics=("parallel",),
                vmem_limit_bytes=vmem_limit,
            ),
        )(x_p, params["w_in"], params["wh"], params["bh"], params["w_out"])
    else:
        # ---- Path B: stream hidden weights over a layer grid axis ----------
        grid = (B_p // tm, L)
        out_p = pl.pallas_call(
            functools.partial(mlp_streaming_kernel, num_layers=L),
            out_shape=jax.ShapeDtypeStruct((B_p, C_p), f32),
            grid_spec=pltpu.PrefetchScalarGridSpec(
                num_scalar_prefetch=0,
                grid=grid,
                in_specs=[
                    pl.BlockSpec((tm, in_p), lambda i, l: (i, 0)),       # x tile
                    pl.BlockSpec((in_p, H_p), lambda i, l: (0, 0)),      # w_in
                    pl.BlockSpec((1, H_p, H_p), lambda i, l: (l, 0, 0)),  # layer W
                    pl.BlockSpec((1, H_p), lambda i, l: (l, 0)),         # layer b
                    pl.BlockSpec((H_p, C_p), lambda i, l: (0, 0)),       # w_out
                ],
                out_specs=pl.BlockSpec((tm, C_p), lambda i, l: (i, 0)),
                scratch_shapes=[pltpu.VMEM((tm, H_p), f32)],   # running activation
            ),
            compiler_params=pltpu.CompilerParams(
                dimension_semantics=("parallel", "arbitrary"),
                vmem_limit_bytes=vmem_limit,
            ),
        )(x_p, params["w_in"], params["wh"], params["bh"], params["w_out"])

    return out_p[:B, :C]


# ----------------------------------------------------------------------------
# Reference / init / smoke test
# ----------------------------------------------------------------------------
def init_params(key, input_size, num_layers, num_classes, hidden_size):
    """Deterministic init mimicking PyTorch's default uniform(-1/sqrt(fan_in), ...)."""
    ks = jax.random.split(key, 4)
    bnd_in = 1.0 / jnp.sqrt(jnp.float32(input_size))
    bnd_h = 1.0 / jnp.sqrt(jnp.float32(hidden_size))
    w_in = jax.random.uniform(ks[0], (hidden_size, input_size), jnp.float32,
                              -bnd_in, bnd_in)
    wh = jax.random.uniform(ks[1], (num_layers, hidden_size, hidden_size),
                            jnp.float32, -bnd_h, bnd_h)
    bh = jax.random.uniform(ks[2], (num_layers, hidden_size), jnp.float32,
                            -bnd_h, bnd_h)
    w_out = jax.random.uniform(ks[3], (num_classes, hidden_size), jnp.float32,
                               -bnd_h, bnd_h)
    return w_in, wh, bh, w_out


def reference_forward(x, w_in, wh, bh, w_out):
    h = x @ w_in.T
    for i in range(wh.shape[0]):
        h = jnp.maximum(h @ wh[i].T + bh[i], 0.0)
    return h @ w_out.T


if __name__ == "__main__":
    # Small, self-consistent sizes implied by the module's __init__.
    batch = 8
    input_size = 32
    num_layers = 2
    num_classes = 10
    hidden_size = 32

    key = jax.random.PRNGKey(0)
    k_x, k_p = jax.random.split(key)
    x = jax.random.normal(k_x, (batch, input_size), jnp.float32)
    w_in, wh, bh, w_out = init_params(k_p, input_size, num_layers,
                                      num_classes, hidden_size)

    # One-time parameter preparation (hoisted out of the per-call hot path).
    params = prepare_params(w_in, wh, bh, w_out)

    ref = reference_forward(x, w_in, wh, bh, w_out)

    # Default (resident-weights) path.
    out = jax.block_until_ready(neuralnet_forward(x, params))
    assert out.shape == (batch, num_classes)
    # bf16 matmul inputs (f32 accumulation): tolerance relaxed vs. the f32 reference.
    assert jnp.allclose(out, ref, atol=2e-2, rtol=2e-2), \
        float(jnp.max(jnp.abs(out - ref)))

    # Also validate the streaming (layer-grid) fallback used when weights
    # exceed usable VMEM (e.g. big hidden_size/num_layers on v7x's 64 MiB).
    out_s = jax.block_until_ready(neuralnet_forward(x, params,
                                                    force_streaming=True))
    assert out_s.shape == (batch, num_classes)
    assert jnp.allclose(out_s, ref, atol=2e-2, rtol=2e-2), \
        float(jnp.max(jnp.abs(out_s - ref)))

    print("KERNEL_OK")
</pallas_src>

<mosaic_0001>
module attributes {stable_mosaic.version = 11 : i64} {
  func.func @mlp_resident_kernel(%arg0: i32, %arg1: memref<8x128xf32, #tpu.memory_space<vmem>>, %arg2: memref<128x128xbf16, #tpu.memory_space<vmem>>, %arg3: memref<2x128x128xbf16, #tpu.memory_space<vmem>>, %arg4: memref<2x128xf32, #tpu.memory_space<vmem>>, %arg5: memref<128x128xbf16, #tpu.memory_space<vmem>>, %arg6: memref<8x128xf32, #tpu.memory_space<vmem>>) attributes {dimension_semantics = [#tpu.dimension_semantics<parallel>], iteration_bounds = array<i64: 1>, scalar_prefetch = 0 : i64, scratch_operands = 0 : i64, tpu.core_type = #tpu.core_type<tc>, window_params = [{transform_indices = @transform_0, window_bounds = array<i64: 8, 128>}, {pipeline_mode = #tpu.pipeline_mode<synchronous>, transform_indices = @transform_1, window_bounds = array<i64: 128, 128>}, {pipeline_mode = #tpu.pipeline_mode<synchronous>, transform_indices = @transform_2, window_bounds = array<i64: 2, 128, 128>}, {pipeline_mode = #tpu.pipeline_mode<synchronous>, transform_indices = @transform_3, window_bounds = array<i64: 2, 128>}, {pipeline_mode = #tpu.pipeline_mode<synchronous>, transform_indices = @transform_4, window_bounds = array<i64: 128, 128>}, {transform_indices = @transform_5, window_bounds = array<i64: 8, 128>}]} {
    %c0 = arith.constant 0 : index
    %c0_0 = arith.constant 0 : index
    %0 = vector.load %arg1[%c0, %c0_0] : memref<8x128xf32, #tpu.memory_space<vmem>>, vector<8x128xf32>
    %1 = arith.truncf %0 : vector<8x128xf32> to vector<8x128xbf16>
    %c0_1 = arith.constant 0 : index
    %c0_2 = arith.constant 0 : index
    %2 = vector.load %arg2[%c0_1, %c0_2] : memref<128x128xbf16, #tpu.memory_space<vmem>>, vector<128x128xbf16>
    %cst = arith.constant dense<0.000000e+00> : vector<8x128xf32>
    %3 = tpu.matmul %1, %2, %cst {dimension_numbers = #tpu.dot_dimension_numbers<[1], [0], [0], [1], [0, 0, 1, 1], [], []>} : vector<8x128xbf16>, vector<128x128xbf16>, vector<8x128xf32> -> vector<8x128xf32>
    %4 = arith.truncf %3 : vector<8x128xf32> to vector<8x128xbf16>
    %c0_3 = arith.constant 0 : index
    %c0_4 = arith.constant 0 : index
    %c0_5 = arith.constant 0 : index
    %5 = vector.load %arg3[%c0_3, %c0_4, %c0_5] : memref<2x128x128xbf16, #tpu.memory_space<vmem>>, vector<1x128x128xbf16>
    %6 = vector.shape_cast %5 : vector<1x128x128xbf16> to vector<128x128xbf16>
    %cst_6 = arith.constant dense<0.000000e+00> : vector<8x128xf32>
    %7 = tpu.matmul %4, %6, %cst_6 {dimension_numbers = #tpu.dot_dimension_numbers<[1], [0], [0], [1], [0, 0, 1, 1], [], []>} : vector<8x128xbf16>, vector<128x128xbf16>, vector<8x128xf32> -> vector<8x128xf32>
    %c0_7 = arith.constant 0 : index
    %c0_8 = arith.constant 0 : index
    %8 = vector.load %arg4[%c0_7, %c0_8] : memref<2x128xf32, #tpu.memory_space<vmem>>, vector<1x128xf32>
    %9 = vector.shape_cast %8 : vector<1x128xf32> to vector<128xf32>
    %10 = vector.shape_cast %9 : vector<128xf32> to vector<1x128xf32>
    %11 = vector.broadcast %10 : vector<1x128xf32> to vector<8x128xf32>
    %12 = arith.addf %7, %11 : vector<8x128xf32>
    %cst_9 = arith.constant 0.000000e+00 : f32
    %13 = vector.broadcast %cst_9 : f32 to vector<8x128xf32>
    %14 = arith.maximumf %12, %13 : vector<8x128xf32>
    %15 = arith.truncf %14 : vector<8x128xf32> to vector<8x128xbf16>
    %c1 = arith.constant 1 : index
    %c0_10 = arith.constant 0 : index
    %c0_11 = arith.constant 0 : index
    %16 = vector.load %arg3[%c1, %c0_10, %c0_11] : memref<2x128x128xbf16, #tpu.memory_space<vmem>>, vector<1x128x128xbf16>
    %17 = vector.shape_cast %16 : vector<1x128x128xbf16> to vector<128x128xbf16>
    %cst_12 = arith.constant dense<0.000000e+00> : vector<8x128xf32>
    %18 = tpu.matmul %15, %17, %cst_12 {dimension_numbers = #tpu.dot_dimension_numbers<[1], [0], [0], [1], [0, 0, 1, 1], [], []>} : vector<8x128xbf16>, vector<128x128xbf16>, vector<8x128xf32> -> vector<8x128xf32>
    %c1_13 = arith.constant 1 : index
    %c0_14 = arith.constant 0 : index
    %19 = vector.load %arg4[%c1_13, %c0_14] : memref<2x128xf32, #tpu.memory_space<vmem>>, vector<1x128xf32>
    %20 = vector.shape_cast %19 : vector<1x128xf32> to vector<128xf32>
    %21 = vector.shape_cast %20 : vector<128xf32> to vector<1x128xf32>
    %22 = vector.broadcast %21 : vector<1x128xf32> to vector<8x128xf32>
    %23 = arith.addf %18, %22 : vector<8x128xf32>
    %cst_15 = arith.constant 0.000000e+00 : f32
    %24 = vector.broadcast %cst_15 : f32 to vector<8x128xf32>
    %25 = arith.maximumf %23, %24 : vector<8x128xf32>
    %26 = arith.truncf %25 : vector<8x128xf32> to vector<8x128xbf16>
    %c0_16 = arith.constant 0 : index
    %c0_17 = arith.constant 0 : index
    %27 = vector.load %arg5[%c0_16, %c0_17] : memref<128x128xbf16, #tpu.memory_space<vmem>>, vector<128x128xbf16>
    %cst_18 = arith.constant dense<0.000000e+00> : vector<8x128xf32>
    %28 = tpu.matmul %26, %27, %cst_18 {dimension_numbers = #tpu.dot_dimension_numbers<[1], [0], [0], [1], [0, 0, 1, 1], [], []>} : vector<8x128xbf16>, vector<128x128xbf16>, vector<8x128xf32> -> vector<8x128xf32>
    %c0_19 = arith.constant 0 : index
    %c0_20 = arith.constant 0 : index
    %29 = vector.load %arg6[%c0_19, %c0_20] : memref<8x128xf32, #tpu.memory_space<vmem>>, vector<8x128xf32>
    tpu.vector_store %arg6[%c0_19, %c0_20], %28 {strides = array<i32>} : memref<8x128xf32, #tpu.memory_space<vmem>>, vector<8x128xf32>,
    return
  }
  func.func @transform_0(%arg0: i32) -> (i32, i32) {
    %c0_i32 = arith.constant 0 : i32
    %c0_i32_0 = arith.constant 0 : i32
    return %arg0, %c0_i32 : i32, i32
  }
  func.func @transform_1(%arg0: i32) -> (i32, i32) {
    %c0_i32 = arith.constant 0 : i32
    %c0_i32_0 = arith.constant 0 : i32
    %c0_i32_1 = arith.constant 0 : i32
    return %c0_i32, %c0_i32_0 : i32, i32
  }
  func.func @transform_2(%arg0: i32) -> (i32, i32, i32) {
    %c0_i32 = arith.constant 0 : i32
    %c0_i32_0 = arith.constant 0 : i32
    %c0_i32_1 = arith.constant 0 : i32
    %c0_i32_2 = arith.constant 0 : i32
    return %c0_i32, %c0_i32_0, %c0_i32_1 : i32, i32, i32
  }
  func.func @transform_3(%arg0: i32) -> (i32, i32) {
    %c0_i32 = arith.constant 0 : i32
    %c0_i32_0 = arith.constant 0 : i32
    %c0_i32_1 = arith.constant 0 : i32
    return %c0_i32, %c0_i32_0 : i32, i32
  }
  func.func @transform_4(%arg0: i32) -> (i32, i32) {
    %c0_i32 = arith.constant 0 : i32
    %c0_i32_0 = arith.constant 0 : i32
    %c0_i32_1 = arith.constant 0 : i32
    return %c0_i32, %c0_i32_0 : i32, i32
  }
  func.func @transform_5(%arg0: i32) -> (i32, i32) {
    %c0_i32 = arith.constant 0 : i32
    %c0_i32_0 = arith.constant 0 : i32
    return %arg0, %c0_i32 : i32, i32
  }
}

</mosaic_0001>

<llo_original>
// kernel: tpu_custom_call.1
$region0: #{tpu_custom_call.1}
  #allocation0 [shape = 'u32[]', space=smem, size = 0x4, offset = 0x4, fixed_abs, tag = 'smem constant byte address 0x4 - core index']
  #allocation1 [shape = 'u32[72,128]{1,0:T(1,128)}', space=vmem, size = 0x9000, scoped, tag = 'internal scratch']
  %s0 = inlined_call_operand.hbm [shape: f32[8,128], index: 0, kind: input, shape index: {}]
  %s1 = inlined_call_operand.hbm [shape: bf16[128,128], index: 1, kind: input, shape index: {}]
  %s2 = inlined_call_operand.hbm [shape: bf16[2,128,128], index: 2, kind: input, shape index: {}]
  %s3 = inlined_call_operand.vmem [shape: f32[2,128], index: 3, kind: input, shape index: {}]
  %s4 = inlined_call_operand.hbm [shape: bf16[128,128], index: 4, kind: input, shape index: {}]
  %s5 = inlined_call_operand.hbm [shape: f32[8,128], index: 5, kind: output, shape index: {}]
  %s6 = sld [smem:[#allocation0]]
  $region46: #{tpu_custom_call.1} parent=0
    _
  %s8 = ssub.s32 1, %s6
  %s9 = scalar_select 0, %s8, %s6
  $region1: #{tpu_custom_call.1} parent=0
    #allocation2 [shape = 'u8[4096]{0}', space=vmem, size = 0x1000, scoped, tag = 'input window, operand 0, single buffered']
    #allocation3 [shape = 's32[1]{0}', space=sflag, size = 0x4, scoped, tag = 'scoped memory for tpu_custom_call.1']
    #allocation4 [shape = 's32[1]{0}', space=sflag, size = 0x4, scoped, tag = 'scoped memory for tpu_custom_call.1']
    #allocation5 [shape = 'u8[32768]{0}', space=vmem, size = 0x8000, scoped, tag = 'input window, operand 1, single buffered']
    #allocation6 [shape = 's32[1]{0}', space=sflag, size = 0x4, scoped, tag = 'scoped memory for tpu_custom_call.1']
    #allocation7 [shape = 'u8[65536]{0}', space=vmem, size = 0x10000, scoped, tag = 'input window, operand 2, single buffered']
    #allocation8 [shape = 'u8[32768]{0}', space=vmem, size = 0x8000, scoped, tag = 'input window, operand 4, single buffered']
    #allocation9 [shape = 's32[1]{0}', space=sflag, size = 0x4, scoped, tag = 'scoped memory for tpu_custom_call.1']
    #allocation10 [shape = 'u8[4096]{0}', space=vmem, size = 0x1000, scoped, tag = 'output window, operand 0, single buffered']
    %10 = vsyncpa [#allocation3], 0
    %11 = vsyncpa [#allocation6], 0
    %12 = vsyncpa [#allocation9], 0
    %13 = vsyncpa [#allocation4], 0
    // Predicated region
    $region2: #{tpu_custom_call.1} parent=1 // pred_check
      _
    $region3: #{tpu_custom_call.1} parent=1 // pred_check_branch
      %15 = sbr.rel (0) target = $region5
    $region4: #{tpu_custom_call.1} parent=1 // pred_region
      %17 = vsyncadd [#allocation3], 0
      %s19 = sshll.u32 %s0, 4
      %s20 = int_to_ptr.hbm [resolvable:$true] %s19
      %s21 = sshll.u32 [#allocation2], 4
      %s22 = int_to_ptr.vmem [resolvable:$true] %s21
      %24 = dma.hbm_to_vmem [thread:$0]  %s20, 128, %s22, [#allocation3]
    $region5: #{tpu_custom_call.1} parent=1 // pred_fallthru
      _
    // Predicated region
    $region6: #{tpu_custom_call.1} parent=1 // pred_check
      _
    $region7: #{tpu_custom_call.1} parent=1 // pred_check_branch
      %26 = sbr.rel (0) target = $region9
    $region8: #{tpu_custom_call.1} parent=1 // pred_region
      %28 = vsyncadd [#allocation6], 0
      %s29 = sshll.u32 %s1, 4
      %s30 = int_to_ptr.hbm [resolvable:$true] %s29
      %s31 = sshll.u32 [#allocation5], 4
      %s32 = int_to_ptr.vmem [resolvable:$true] %s31
      %37 = dma.hbm_to_vmem [thread:$0]  %s30, 1024, %s32, [#allocation6], 64, 64, 4
    $region9: #{tpu_custom_call.1} parent=1 // pred_fallthru
      _
    // Predicated region
    $region10: #{tpu_custom_call.1} parent=1 // pred_check
      _
    $region11: #{tpu_custom_call.1} parent=1 // pred_check_branch
      %39 = sbr.rel (0) target = $region13
    $region12: #{tpu_custom_call.1} parent=1 // pred_region
      %41 = vsyncadd [#allocation6], 0
      %s42 = sshll.u32 %s2, 4
      %s43 = int_to_ptr.hbm [resolvable:$true] %s42
      %s44 = sshll.u32 [#allocation7], 4
      %s45 = int_to_ptr.vmem [resolvable:$true] %s44
      %50 = dma.hbm_to_vmem [thread:$0]  %s43, 2048, %s45, [#allocation6], 64, 64, 4
    $region13: #{tpu_custom_call.1} parent=1 // pred_fallthru
      _
    // Predicated region
    $region14: #{tpu_custom_call.1} parent=1 // pred_check
      _
    $region15: #{tpu_custom_call.1} parent=1 // pred_check_branch
      %52 = sbr.rel (0) target = $region17
    $region16: #{tpu_custom_call.1} parent=1 // pred_region
      _
    $region17: #{tpu_custom_call.1} parent=1 // pred_fallthru
      _
    // Predicated region
    $region18: #{tpu_custom_call.1} parent=1 // pred_check
      _
    $region19: #{tpu_custom_call.1} parent=1 // pred_check_branch
      %54 = sbr.rel (0) target = $region21
    $region20: #{tpu_custom_call.1} parent=1 // pred_region
      %56 = vsyncadd [#allocation9], 0
      %s57 = sshll.u32 %s4, 4
      %s58 = int_to_ptr.hbm [resolvable:$true] %s57
      %s59 = sshll.u32 [#allocation8], 4
      %s60 = int_to_ptr.vmem [resolvable:$true] %s59
      %65 = dma.hbm_to_vmem [thread:$0]  %s58, 1024, %s60, [#allocation9], 64, 64, 4
    $region21: #{tpu_custom_call.1} parent=1 // pred_fallthru
      _
    // Predicated region
    $region22: #{tpu_custom_call.1} parent=1 // pred_check
      _
    $region23: #{tpu_custom_call.1} parent=1 // pred_check_branch
      %67 = sbr.rel (0) target = $region25
    $region24: #{tpu_custom_call.1} parent=1 // pred_region
      %69 = dma.done [#allocation3], 128
    $region25: #{tpu_custom_call.1} parent=1 // pred_fallthru
      _
    // Predicated region
    $region26: #{tpu_custom_call.1} parent=1 // pred_check
      _
    $region27: #{tpu_custom_call.1} parent=1 // pred_check_branch
      %71 = sbr.rel (0) target = $region29
    $region28: #{tpu_custom_call.1} parent=1 // pred_region
      %73 = dma.done [#allocation6], 1024
    $region29: #{tpu_custom_call.1} parent=1 // pred_fallthru
      _
    // Predicated region
    $region30: #{tpu_custom_call.1} parent=1 // pred_check
      _
    $region31: #{tpu_custom_call.1} parent=1 // pred_check_branch
      %75 = sbr.rel (0) target = $region33
    $region32: #{tpu_custom_call.1} parent=1 // pred_region
      %77 = dma.done [#allocation6], 2048
    $region33: #{tpu_custom_call.1} parent=1 // pred_fallthru
      _
    // Predicated region
    $region34: #{tpu_custom_call.1} parent=1 // pred_check
      _
    $region35: #{tpu_custom_call.1} parent=1 // pred_check_branch
      %79 = sbr.rel (0) target = $region37
    $region36: #{tpu_custom_call.1} parent=1 // pred_region
      %81 = dma.done [#allocation9], 1024
    $region37: #{tpu_custom_call.1} parent=1 // pred_fallthru
      _
    %v82 = vld [vmem:[#allocation2] sm:$0xff]
    %v83 = vpack.c.bf16 %v82, %v82
    %v84 = vld [vmem:[#allocation5] sm:$0xf]
    %v85 = vld [vmem:[#allocation5 + $0x4] sm:$0xf]
    %v86 = vld [vmem:[#allocation5 + $0x8] sm:$0xf]
    %v87 = vld [vmem:[#allocation5 + $0xc] sm:$0xf]
    %v88 = vld [vmem:[#allocation5 + $0x10] sm:$0xf]
    %v89 = vld [vmem:[#allocation5 + $0x14] sm:$0xf]
    %v90 = vld [vmem:[#allocation5 + $0x18] sm:$0xf]
    %v91 = vld [vmem:[#allocation5 + $0x1c] sm:$0xf]
    %v92 = vld [vmem:[#allocation5 + $0x20] sm:$0xf]
    %v93 = vld [vmem:[#allocation5 + $0x24] sm:$0xf]
    %v94 = vld [vmem:[#allocation5 + $0x28] sm:$0xf]
    %v95 = vld [vmem:[#allocation5 + $0x2c] sm:$0xf]
    %v96 = vld [vmem:[#allocation5 + $0x30] sm:$0xf]
    %v97 = vld [vmem:[#allocation5 + $0x34] sm:$0xf]
    %v98 = vld [vmem:[#allocation5 + $0x38] sm:$0xf]
    %v99 = vld [vmem:[#allocation5 + $0x3c] sm:$0xf]
    %v116 = vunpack.c.l.b16 %v84
    %v117 = vunpack.c.l.b16 %v85
    %v118 = vunpack.c.l.b16 %v86
    %v119 = vunpack.c.l.b16 %v87
    %v120 = vunpack.c.l.b16 %v88
    %v121 = vunpack.c.l.b16 %v89
    %v122 = vunpack.c.l.b16 %v90
    %v123 = vunpack.c.l.b16 %v91
    %v124 = vunpack.c.l.b16 %v92
    %v125 = vunpack.c.l.b16 %v93
    %v126 = vunpack.c.l.b16 %v94
    %v127 = vunpack.c.l.b16 %v95
    %v128 = vunpack.c.l.b16 %v96
    %v129 = vunpack.c.l.b16 %v97
    %v130 = vunpack.c.l.b16 %v98
    %v131 = vunpack.c.l.b16 %v99
    %v132 = vpack.c.b16 %v117, %v116
    %v133 = vpack.c.b16 %v119, %v118
    %v134 = vpack.c.b16 %v121, %v120
    %v135 = vpack.c.b16 %v123, %v122
    %v136 = vpack.c.b16 %v125, %v124
    %v137 = vpack.c.b16 %v127, %v126
    %v138 = vpack.c.b16 %v129, %v128
    %v139 = vpack.c.b16 %v131, %v130
    %148 = vmatpush.bf16.msra.mxu0 %v139
    %149 = vmatpush.bf16.msra.mxu0 %v138
    %150 = vmatpush.bf16.msra.mxu0 %v137
    %151 = vmatpush.bf16.msra.mxu0 %v136
    %152 = vmatpush.bf16.msra.mxu0 %v135
    %153 = vmatpush.bf16.msra.mxu0 %v134
    %154 = vmatpush.bf16.msra.mxu0 %v133
    %155 = vmatpush.bf16.msra.mxu0 %v132
    %156 = vmatmul.bf16.gmra.mxu0 %v83
    %v157 = vpop.f32.mrf.mxu0
    %v158 = vadd.f32 0.0, %v157
    %v159 = vpop.f32.mrf.mxu0
    %160 = vdwg.mxu0
    %v161 = vpack.c.bf16 %v158, %v158
    %v162 = vld [vmem:[#allocation7] sm:$0xf]
    %v163 = vld [vmem:[#allocation7 + $0x4] sm:$0xf]
    %v164 = vld [vmem:[#allocation7 + $0x8] sm:$0xf]
    %v165 = vld [vmem:[#allocation7 + $0xc] sm:$0xf]
    %v166 = vld [vmem:[#allocation7 + $0x10] sm:$0xf]
    %v167 = vld [vmem:[#allocation7 + $0x14] sm:$0xf]
    %v168 = vld [vmem:[#allocation7 + $0x18] sm:$0xf]
    %v169 = vld [vmem:[#allocation7 + $0x1c] sm:$0xf]
    %v170 = vld [vmem:[#allocation7 + $0x20] sm:$0xf]
    %v171 = vld [vmem:[#allocation7 + $0x24] sm:$0xf]
    %v172 = vld [vmem:[#allocation7 + $0x28] sm:$0xf]
    %v173 = vld [vmem:[#allocation7 + $0x2c] sm:$0xf]
    %v174 = vld [vmem:[#allocation7 + $0x30] sm:$0xf]
    %v175 = vld [vmem:[#allocation7 + $0x34] sm:$0xf]
    %v176 = vld [vmem:[#allocation7 + $0x38] sm:$0xf]
    %v177 = vld [vmem:[#allocation7 + $0x3c] sm:$0xf]
    %v178 = vld [vmem:[%s3] sm:$0x1]
    %v179 = vperm.slane %v178, 0
    %v196 = vunpack.c.l.b16 %v162
    %v197 = vunpack.c.l.b16 %v163
    %v198 = vunpack.c.l.b16 %v164
    %v199 = vunpack.c.l.b16 %v165
    %v200 = vunpack.c.l.b16 %v166
    %v201 = vunpack.c.l.b16 %v167
    %v202 = vunpack.c.l.b16 %v168
    %v203 = vunpack.c.l.b16 %v169
    %v204 = vunpack.c.l.b16 %v170
    %v205 = vunpack.c.l.b16 %v171
    %v206 = vunpack.c.l.b16 %v172
    %v207 = vunpack.c.l.b16 %v173
    %v208 = vunpack.c.l.b16 %v174
    %v209 = vunpack.c.l.b16 %v175
    %v210 = vunpack.c.l.b16 %v176
    %v211 = vunpack.c.l.b16 %v177
    %v212 = vpack.c.b16 %v197, %v196
    %v213 = vpack.c.b16 %v199, %v198
    %v214 = vpack.c.b16 %v201, %v200
    %v215 = vpack.c.b16 %v203, %v202
    %v216 = vpack.c.b16 %v205, %v204
    %v217 = vpack.c.b16 %v207, %v206
    %v218 = vpack.c.b16 %v209, %v208
    %v219 = vpack.c.b16 %v211, %v210
    %228 = vmatpush.bf16.msra.mxu0 %v219
    %229 = vmatpush.bf16.msra.mxu0 %v218
    %230 = vmatpush.bf16.msra.mxu0 %v217
    %231 = vmatpush.bf16.msra.mxu0 %v216
    %232 = vmatpush.bf16.msra.mxu0 %v215
    %233 = vmatpush.bf16.msra.mxu0 %v214
    %234 = vmatpush.bf16.msra.mxu0 %v213
    %235 = vmatpush.bf16.msra.mxu0 %v212
    %236 = vmatmul.bf16.gmra.mxu0 %v161
    %v237 = vpop.f32.mrf.mxu0
    %v238 = vadd.f32 %v179, %v237
    %v239 = vpop.f32.mrf.mxu0
    %240 = vdwg.mxu0
    %v241 = vmax.f32 %v238, 0.0
    %v242 = vpack.c.bf16 %v241, %v241
    %s243 = scalar_lea.vmem [#allocation7], 64
    %v244 = vld [vmem:[%s243] sm:$0xf]
    %v245 = vld [vmem:[%s243 + $0x4] sm:$0xf]
    %v246 = vld [vmem:[%s243 + $0x8] sm:$0xf]
    %v247 = vld [vmem:[%s243 + $0xc] sm:$0xf]
    %v248 = vld [vmem:[%s243 + $0x10] sm:$0xf]
    %v249 = vld [vmem:[%s243 + $0x14] sm:$0xf]
    %v250 = vld [vmem:[%s243 + $0x18] sm:$0xf]
    %v251 = vld [vmem:[%s243 + $0x1c] sm:$0xf]
    %v252 = vld [vmem:[%s243 + $0x20] sm:$0xf]
    %v253 = vld [vmem:[%s243 + $0x24] sm:$0xf]
    %v254 = vld [vmem:[%s243 + $0x28] sm:$0xf]
    %v255 = vld [vmem:[%s243 + $0x2c] sm:$0xf]
    %v256 = vld [vmem:[%s243 + $0x30] sm:$0xf]
    %v257 = vld [vmem:[%s243 + $0x34] sm:$0xf]
    %v258 = vld [vmem:[%s243 + $0x38] sm:$0xf]
    %v259 = vld [vmem:[%s243 + $0x3c] sm:$0xf]
    %v260 = vld [vmem:[%s3 + $0x1] sm:$0x1]
    %v261 = vperm.slane %v260, 0
    %v278 = vunpack.c.l.b16 %v244
    %v279 = vunpack.c.l.b16 %v245
    %v280 = vunpack.c.l.b16 %v246
    %v281 = vunpack.c.l.b16 %v247
    %v282 = vunpack.c.l.b16 %v248
    %v283 = vunpack.c.l.b16 %v249
    %v284 = vunpack.c.l.b16 %v250
    %v285 = vunpack.c.l.b16 %v251
    %v286 = vunpack.c.l.b16 %v252
    %v287 = vunpack.c.l.b16 %v253
    %v288 = vunpack.c.l.b16 %v254
    %v289 = vunpack.c.l.b16 %v255
    %v290 = vunpack.c.l.b16 %v256
    %v291 = vunpack.c.l.b16 %v257
    %v292 = vunpack.c.l.b16 %v258
    %v293 = vunpack.c.l.b16 %v259
    %v294 = vpack.c.b16 %v279, %v278
    %v295 = vpack.c.b16 %v281, %v280
    %v296 = vpack.c.b16 %v283, %v282
    %v297 = vpack.c.b16 %v285, %v284
    %v298 = vpack.c.b16 %v287, %v286
    %v299 = vpack.c.b16 %v289, %v288
    %v300 = vpack.c.b16 %v291, %v290
    %v301 = vpack.c.b16 %v293, %v292
    %310 = vmatpush.bf16.msra.mxu0 %v301
    %311 = vmatpush.bf16.msra.mxu0 %v300
    %312 = vmatpush.bf16.msra.mxu0 %v299
    %313 = vmatpush.bf16.msra.mxu0 %v298
    %314 = vmatpush.bf16.msra.mxu0 %v297
    %315 = vmatpush.bf16.msra.mxu0 %v296
    %316 = vmatpush.bf16.msra.mxu0 %v295
    %317 = vmatpush.bf16.msra.mxu0 %v294
    %318 = vmatmul.bf16.gmra.mxu0 %v242
    %v319 = vpop.f32.mrf.mxu0
    %v320 = vadd.f32 %v261, %v319
    %v321 = vpop.f32.mrf.mxu0
    %322 = vdwg.mxu0
    %v323 = vmax.f32 %v320, 0.0
    %v324 = vpack.c.bf16 %v323, %v323
    %v325 = vld [vmem:[#allocation8] sm:$0xf]
    %v326 = vld [vmem:[#allocation8 + $0x4] sm:$0xf]
    %v327 = vld [vmem:[#allocation8 + $0x8] sm:$0xf]
    %v328 = vld [vmem:[#allocation8 + $0xc] sm:$0xf]
    %v329 = vld [vmem:[#allocation8 + $0x10] sm:$0xf]
    %v330 = vld [vmem:[#allocation8 + $0x14] sm:$0xf]
    %v331 = vld [vmem:[#allocation8 + $0x18] sm:$0xf]
    %v332 = vld [vmem:[#allocation8 + $0x1c] sm:$0xf]
    %v333 = vld [vmem:[#allocation8 + $0x20] sm:$0xf]
    %v334 = vld [vmem:[#allocation8 + $0x24] sm:$0xf]
    %v335 = vld [vmem:[#allocation8 + $0x28] sm:$0xf]
    %v336 = vld [vmem:[#allocation8 + $0x2c] sm:$0xf]
    %v337 = vld [vmem:[#allocation8 + $0x30] sm:$0xf]
    %v338 = vld [vmem:[#allocation8 + $0x34] sm:$0xf]
    %v339 = vld [vmem:[#allocation8 + $0x38] sm:$0xf]
    %v340 = vld [vmem:[#allocation8 + $0x3c] sm:$0xf]
    %v357 = vunpack.c.l.b16 %v325
    %v358 = vunpack.c.l.b16 %v326
    %v359 = vunpack.c.l.b16 %v327
    %v360 = vunpack.c.l.b16 %v328
    %v361 = vunpack.c.l.b16 %v329
    %v362 = vunpack.c.l.b16 %v330
    %v363 = vunpack.c.l.b16 %v331
    %v364 = vunpack.c.l.b16 %v332
    %v365 = vunpack.c.l.b16 %v333
    %v366 = vunpack.c.l.b16 %v334
    %v367 = vunpack.c.l.b16 %v335
    %v368 = vunpack.c.l.b16 %v336
    %v369 = vunpack.c.l.b16 %v337
    %v370 = vunpack.c.l.b16 %v338
    %v371 = vunpack.c.l.b16 %v339
    %v372 = vunpack.c.l.b16 %v340
    %v373 = vpack.c.b16 %v358, %v357
    %v374 = vpack.c.b16 %v360, %v359
    %v375 = vpack.c.b16 %v362, %v361
    %v376 = vpack.c.b16 %v364, %v363
    %v377 = vpack.c.b16 %v366, %v365
    %v378 = vpack.c.b16 %v368, %v367
    %v379 = vpack.c.b16 %v370, %v369
    %v380 = vpack.c.b16 %v372, %v371
    %389 = vmatpush.bf16.msra.mxu0 %v380
    %390 = vmatpush.bf16.msra.mxu0 %v379
    %391 = vmatpush.bf16.msra.mxu0 %v378
    %392 = vmatpush.bf16.msra.mxu0 %v377
    %393 = vmatpush.bf16.msra.mxu0 %v376
    %394 = vmatpush.bf16.msra.mxu0 %v375
    %395 = vmatpush.bf16.msra.mxu0 %v374
    %396 = vmatpush.bf16.msra.mxu0 %v373
    %397 = vmatmul.bf16.gmra.mxu0 %v324
    %v398 = vpop.f32.mrf.mxu0
    %v399 = vadd.f32 0.0, %v398
    %v400 = vpop.f32.mrf.mxu0
    %401 = vdwg.mxu0
    %402 = vst [vmem:[#allocation10] sm:$0xff] %v399
    // Predicated region
    $region38: #{tpu_custom_call.1} parent=1 // pred_check
      _
    $region39: #{tpu_custom_call.1} parent=1 // pred_check_branch
      %404 = sbr.rel (0) target = $region41
    $region40: #{tpu_custom_call.1} parent=1 // pred_region
      %406 = vsyncadd [#allocation4], 0
      %s408 = sshll.u32 [#allocation10], 4
      %s409 = int_to_ptr.vmem [resolvable:$true] %s408
      %s410 = sshll.u32 %s5, 4
      %s411 = int_to_ptr.hbm [resolvable:$true] %s410
      %413 = dma.vmem_to_hbm [thread:$0]  %s409, 128, %s411, [#allocation4]
    $region41: #{tpu_custom_call.1} parent=1 // pred_fallthru
      _
    // Predicated region
    $region42: #{tpu_custom_call.1} parent=1 // pred_check
      _
    $region43: #{tpu_custom_call.1} parent=1 // pred_check_branch
      %415 = sbr.rel (0) target = $region45
    $region44: #{tpu_custom_call.1} parent=1 // pred_region
      %417 = dma.done [#allocation4], 128
    $region45: #{tpu_custom_call.1} parent=1 // pred_fallthru
      _
    %418 = vsyncpa [#allocation3], 1
    %419 = vsyncpa [#allocation6], 1
    %420 = vsyncpa [#allocation9], 1
    %421 = vsyncpa [#allocation4], 1

</llo_original>
